<compile_context>
chip_gen: v7x
topology: tpu7x:2x2x1
jax: 0.10.0
libtpu: 0.0.40
codegen_flags: <defaults>
</compile_context>

<pallas_src>
import functools

import jax
import jax.numpy as jnp
from jax.experimental import pallas as pl
from jax.experimental.pallas import tpu as pltpu

LANE = 128
SUBLANE = 8
_TARGET_TILE_BYTES = 2 << 20  # ~2 MiB per input tile


def _levels(num_bits: int, signed: bool, is_weights: bool):
    if signed:
        level_high = 2 ** (num_bits - 1) - 1
        level_low = -(level_high + 1)
        if is_weights:
            level_low += 1
    else:
        level_high = 2 ** num_bits - 1
        level_low = 0
    return level_low, level_high


def _quantize_kernel(scale_ref, x_ref, o_ref, *, level_low, level_high):
    # scale is a learned scalar parameter, kept in SMEM.
    # NOTE: like the reference, no guard against scale <= 0 (would produce inf/NaN).
    scale = scale_ref[0]
    lh = jnp.float32(level_high)
    ll = jnp.float32(level_low)
    inv_scale = lh / scale          # scalar ops, once per grid step
    scale_over_lh = scale / lh
    y = x_ref[...].astype(jnp.float32) * inv_scale     # map to integer grid (f32 compute)
    y = jnp.round(jnp.clip(y, ll, lh))                 # clamp + round half-to-even
    o_ref[...] = (y * scale_over_lh).astype(o_ref.dtype)


def quantize_forward(x, scale, *, num_bits=8, signed=True, is_weights=False, qbias=None):
    """Pallas fake-quantization, elementwise over any-shaped x (kept in its own dtype)."""
    # TODO(synk): qbias in the reference module is an empty zeros(0) parameter and is unused
    # in the default forward path; not applied here.
    level_low, level_high = _levels(num_bits, signed, is_weights)

    orig_shape = x.shape
    orig_dtype = x.dtype
    flat = x.reshape(-1)                 # keep original dtype through HBM
    n = flat.shape[0]

    # Pad only when the lane dimension would be ragged (n not a multiple of 128).
    padded = (n % LANE) != 0
    if padded:
        n_round = ((n + LANE - 1) // LANE) * LANE
        flat = jnp.pad(flat, (0, n_round - n))
    x2 = flat.reshape(-1, LANE)          # (rows, 128) lane-dense slab
    rows = x2.shape[0]

    # Tile sizing: ~2 MiB per input tile, rows rounded to the dtype's native sublane multiple.
    itemsize = jnp.dtype(orig_dtype).itemsize
    sub_mult = SUBLANE * max(1, 4 // max(1, itemsize))   # f32:8, bf16:16, int8:32
    target_rows = max(sub_mult,
                      (_TARGET_TILE_BYTES // (LANE * itemsize)) // sub_mult * sub_mult)
    tile_rows = min(target_rows, rows)
    # Keep at least 2 grid steps when the slab is big enough so megacore sharding has work.
    if tile_rows == rows and rows >= 2 * sub_mult:
        half = (rows + 1) // 2
        tile_rows = ((half + sub_mult - 1) // sub_mult) * sub_mult

    kernel = functools.partial(
        _quantize_kernel, level_low=level_low, level_high=level_high
    )
    scale_arr = jnp.asarray(scale, jnp.float32).reshape(1)

    out2 = pl.pallas_call(
        kernel,
        out_shape=jax.ShapeDtypeStruct((rows, LANE), orig_dtype),
        grid=(pl.cdiv(rows, tile_rows),),
        in_specs=[
            pl.BlockSpec(memory_space=pltpu.MemorySpace.SMEM),        # scale (scalar)
            pl.BlockSpec((tile_rows, LANE), lambda i: (i, 0)),         # x tile
        ],
        out_specs=pl.BlockSpec((tile_rows, LANE), lambda i: (i, 0)),
        compiler_params=pltpu.CompilerParams(
            dimension_semantics=("parallel",)
        ),
    )(scale_arr, x2)

    if padded:
        # Partial-tail path: strip the compiler-padded garbage before reshaping back.
        return out2.reshape(-1)[:n].reshape(orig_shape)
    return out2.reshape(orig_shape)


class QuantizePallas:
    """JAX/Pallas mirror of nncf Quantize(nn.Module)."""

    def __init__(self, qbias=False, num_bits=8, signed=True, is_weights=False):
        # deterministic parameter init, matching the torch module's __init__
        self.signed_tensor = jnp.array([1 if signed else 0], dtype=jnp.int32)
        self.scale = jnp.ones((1,), dtype=jnp.float32)      # nn.Parameter(torch.ones(1))
        self.qbias = jnp.zeros((0,), dtype=jnp.float32) if qbias else None
        self.is_weights = is_weights
        self.num_bits = num_bits
        self.init_stage = False

    @property
    def signed(self):
        return int(self.signed_tensor[0]) == 1

    def __call__(self, x):
        if self.init_stage:
            return x
        return quantize_forward(
            x,
            self.scale,
            num_bits=self.num_bits,
            signed=self.signed,
            is_weights=self.is_weights,
            qbias=self.qbias if (self.qbias is not None and self.qbias.size > 0) else None,
        )


def _reference_quantize(x, scale, num_bits, signed, is_weights):
    # f32 compute, cast back to the input dtype (same semantics as the kernel).
    level_low, level_high = _levels(num_bits, signed, is_weights)
    s = jnp.float32(scale.reshape(())[()])
    y = jnp.clip(x.astype(jnp.float32) * (level_high / s), level_low, level_high)
    return (jnp.round(y) * (s / level_high)).astype(x.dtype)


if __name__ == "__main__":
    key = jax.random.PRNGKey(0)
    module = QuantizePallas(qbias=False, num_bits=8, signed=True, is_weights=False)

    # 1) NCHW activation-style f32 input (lane-aligned path, no pad/slice).
    x = jax.random.normal(key, (2, 4, 16, 16), dtype=jnp.float32) * 1.7
    out = jax.block_until_ready(module(x))
    ref = _reference_quantize(x, module.scale, module.num_bits, module.signed,
                              module.is_weights)
    assert out.shape == x.shape and out.dtype == x.dtype
    assert jnp.max(jnp.abs(out - ref)) <= 1e-6

    # 2) bf16 input with a size that is NOT a multiple of 128 (exercises the pad path and
    #    native-dtype HBM traffic).
    xb = (jax.random.normal(key, (3, 5, 7, 9), dtype=jnp.float32) * 0.9).astype(jnp.bfloat16)
    outb = jax.block_until_ready(module(xb))
    refb = _reference_quantize(xb, module.scale, module.num_bits, module.signed,
                               module.is_weights)
    assert outb.shape == xb.shape and outb.dtype == xb.dtype
    assert jnp.max(jnp.abs(outb.astype(jnp.float32) - refb.astype(jnp.float32))) <= 1e-6

    print("KERNEL_OK")
</pallas_src>

<mosaic_0001>
module attributes {stable_mosaic.version = 11 : i64} {
  func.func @_quantize_kernel(%arg0: i32, %arg1: memref<1xf32, #tpu.memory_space<smem>>, %arg2: memref<8x128xf32, #tpu.memory_space<vmem>>, %arg3: memref<8x128xf32, #tpu.memory_space<vmem>>) attributes {dimension_semantics = [#tpu.dimension_semantics<parallel>], iteration_bounds = array<i64: 2>, scalar_prefetch = 0 : i64, scratch_operands = 0 : i64, tpu.core_type = #tpu.core_type<tc>, window_params = [{transform_indices = @transform_0, window_bounds = array<i64: 1>}, {transform_indices = @transform_1, window_bounds = array<i64: 8, 128>}, {transform_indices = @transform_2, window_bounds = array<i64: 8, 128>}]} {
    %c0 = arith.constant 0 : index
    %0 = memref.load %arg1[%c0] : memref<1xf32, #tpu.memory_space<smem>>
    %cst = arith.constant 1.270000e+02 : f32
    %1 = arith.divf %cst, %0 : f32
    %cst_0 = arith.constant 1.270000e+02 : f32
    %2 = arith.divf %0, %cst_0 : f32
    %c0_1 = arith.constant 0 : index
    %c0_2 = arith.constant 0 : index
    %3 = vector.load %arg2[%c0_1, %c0_2] : memref<8x128xf32, #tpu.memory_space<vmem>>, vector<8x128xf32>
    %4 = vector.broadcast %1 : f32 to vector<8x128xf32>
    %5 = arith.mulf %3, %4 : vector<8x128xf32>
    %cst_3 = arith.constant -1.280000e+02 : f32
    %cst_4 = arith.constant 1.270000e+02 : f32
    %6 = vector.broadcast %cst_3 : f32 to vector<8x128xf32>
    %7 = arith.maximumf %6, %5 : vector<8x128xf32>
    %8 = vector.broadcast %cst_4 : f32 to vector<8x128xf32>
    %9 = arith.minimumf %8, %7 : vector<8x128xf32>
    %10 = math.roundeven %9 : vector<8x128xf32>
    %11 = vector.broadcast %2 : f32 to vector<8x128xf32>
    %12 = arith.mulf %10, %11 : vector<8x128xf32>
    %c0_5 = arith.constant 0 : index
    %c0_6 = arith.constant 0 : index
    %13 = vector.load %arg3[%c0_5, %c0_6] : memref<8x128xf32, #tpu.memory_space<vmem>>, vector<8x128xf32>
    tpu.vector_store %arg3[%c0_5, %c0_6], %12 {strides = array<i32>} : memref<8x128xf32, #tpu.memory_space<vmem>>, vector<8x128xf32>,
    return
  }
  func.func @transform_0(%arg0: i32) -> i32 {
    %c0_i32 = arith.constant 0 : i32
    %c0_i32_0 = arith.constant 0 : i32
    return %c0_i32 : i32
  }
  func.func @transform_1(%arg0: i32) -> (i32, i32) {
    %c0_i32 = arith.constant 0 : i32
    %c0_i32_0 = arith.constant 0 : i32
    return %arg0, %c0_i32 : i32, i32
  }
  func.func @transform_2(%arg0: i32) -> (i32, i32) {
    %c0_i32 = arith.constant 0 : i32
    %c0_i32_0 = arith.constant 0 : i32
    return %arg0, %c0_i32 : i32, i32
  }
}

</mosaic_0001>

<llo_original>
// kernel: tpu_custom_call.1
$region0: #{tpu_custom_call.1}
  #allocation0 [shape = 'u32[]', space=smem, size = 0x4, offset = 0x4, fixed_abs, tag = 'smem constant byte address 0x4 - core index']
  #allocation1 [shape = 'u32[144,128]{1,0:T(1,128)}', space=vmem, size = 0x12000, scoped, tag = 'internal scratch']
  #allocation2 [shape = 'f32[1]{0:T(128)S(6)}', space=smem, size = 0x200, scoped, tag = 'scoped memory for tpu_custom_call.1']
  %s0 = inlined_call_operand.<no memory space> [shape: f32[1], index: 0, kind: input, shape index: {}]
  %s1 = inlined_call_operand.hbm [shape: f32[16,128], index: 1, kind: input, shape index: {}]
  %s2 = inlined_call_operand.hbm [shape: f32[16,128], index: 2, kind: output, shape index: {}]
  %s3 = sld [smem:[#allocation0]]
  $region45: #{tpu_custom_call.1} parent=0
    _
  %s5 = ssub.s32 1, %s3
  %s6 = scalar_select 0, %s5, %s3
  %7 = sst [smem:[#allocation2]] %s0
  $region1: #{tpu_custom_call.1} parent=0
    #allocation3 [shape = 'u8[8192]{0}', space=vmem, size = 0x2000, scoped, tag = 'input window, operand 1']
    #allocation4 [shape = 's32[2]{0}', space=sflag, size = 0x8, scoped, tag = 'scoped memory for tpu_custom_call.1']
    #allocation5 [shape = 's32[2]{0}', space=sflag, size = 0x8, scoped, tag = 'scoped memory for tpu_custom_call.1']
    #allocation6 [shape = 'u8[8192]{0}', space=vmem, size = 0x2000, scoped, tag = 'output window, operand 0']
    %8 = vsyncpa [#allocation4], 0
    %s9 = scalar_lea.sflag [#allocation4], 1
    %10 = vsyncpa %s9, 0
    %11 = vsyncpa [#allocation5], 0
    %s12 = scalar_lea.sflag [#allocation5], 1
    %13 = vsyncpa %s12, 0
    loop: start=0, step=1, limit=4
    $region2: #{tpu_custom_call.1} parent=1 // loop_pre_header
      _
    $region3: #{tpu_custom_call.1} parent=1 // loop_header
      %s15 = sphi 0, %s19
      %p16 = scmp.ge.s32.totalorder %s15, 4
      %s23 = sphi 0, %s23
      %s25 = sphi 0, %s23
      %s26 = sphi 0, %s25
      %s40 = sphi 0, %s26
      %s46 = sphi 0, %s48
      %s49 = sphi 0, %s46
      %s50 = sphi 0, %s49
      %s66 = sphi 0, %s50
      %s72 = sphi 0, %s74
      %s75 = sphi 0, %s72
      %s76 = sphi 0, %s75
      %s92 = sphi 0, %s76
    $region4: #{tpu_custom_call.1} parent=1 // loop_header_branch
      %18 = sbr.rel (%p16) target = $region8
    $region5: #{tpu_custom_call.1} parent=1 // loop_body
      %s20 = ssub.s32 %s15, 1
      %s21 = ssub.s32 %s15, 2
      %s22 = sadd.s32 %s15, 1
      %s24 = sadd.s32 %s23, 1
      %p27 = scmp.eq.s32.totalorder %s15, 1
      %p28 = scmp.ne.s32.totalorder %s23, %s25
      %p29 = scmp.eq.s32.totalorder %s15, 0
      %p30 = por %p28, %p29
      %p31 = scmp.ne.s32.totalorder %s23, %s25
      %p32 = scmp.eq.s32.totalorder %s20, 1
      %p33 = por %p31, %p32
      %p34 = scmp.ne.s32.totalorder %s25, %s26
      %p35 = scmp.eq.s32.totalorder %s20, 0
      %p36 = por %p34, %p35
      %p37 = scmp.ne.s32.totalorder %s25, %s26
      %p38 = scmp.eq.s32.totalorder %s21, 1
      %p39 = por %p37, %p38
      %p41 = scmp.ne.s32.totalorder %s26, %s40
      %p42 = scmp.eq.s32.totalorder %s21, 0
      %p43 = por %p41, %p42
      %s44 = ssub.s32 %s15, %s22
      %p45 = scmp.eq.s32.totalorder %s44, 0
      %s47 = sadd.s32 %s46, 1
      %s48 = scalar_select %p45, %s46, %s47
      %p51 = pneg %p45
      %p52 = scmp.eq.s32.totalorder %s15, 1
      %p53 = por %p51, %p52
      %p54 = scmp.ne.s32.totalorder %s46, %s49
      %p55 = scmp.eq.s32.totalorder %s15, 0
      %p56 = por %p54, %p55
      %p57 = scmp.ne.s32.totalorder %s46, %s49
      %p58 = scmp.eq.s32.totalorder %s20, 1
      %p59 = por %p57, %p58
      %p60 = scmp.ne.s32.totalorder %s49, %s50
      %p61 = scmp.eq.s32.totalorder %s20, 0
      %p62 = por %p60, %p61
      %p63 = scmp.ne.s32.totalorder %s49, %s50
      %p64 = scmp.eq.s32.totalorder %s21, 1
      %p65 = por %p63, %p64
      %p67 = scmp.ne.s32.totalorder %s50, %s66
      %p68 = scmp.eq.s32.totalorder %s21, 0
      %p69 = por %p67, %p68
      %s70 = ssub.s32 %s15, %s22
      %p71 = scmp.eq.s32.totalorder %s70, 0
      %s73 = sadd.s32 %s72, 1
      %s74 = scalar_select %p71, %s72, %s73
      %p77 = pneg %p71
      %p78 = scmp.eq.s32.totalorder %s15, 1
      %p79 = por %p77, %p78
      %p80 = scmp.ne.s32.totalorder %s72, %s75
      %p81 = scmp.eq.s32.totalorder %s15, 0
      %p82 = por %p80, %p81
      %p83 = scmp.ne.s32.totalorder %s72, %s75
      %p84 = scmp.eq.s32.totalorder %s20, 1
      %p85 = por %p83, %p84
      %p86 = scmp.ne.s32.totalorder %s75, %s76
      %p87 = scmp.eq.s32.totalorder %s20, 0
      %p88 = por %p86, %p87
      %p89 = scmp.ne.s32.totalorder %s75, %s76
      %p90 = scmp.eq.s32.totalorder %s21, 1
      %p91 = por %p89, %p90
      %p93 = scmp.ne.s32.totalorder %s76, %s92
      %p94 = scmp.eq.s32.totalorder %s21, 0
      %p95 = por %p93, %p94
      %p96 = scmp.le.s32.totalorder 1, %s15
      %p97 = scmp.lt.s32.totalorder %s15, 3
      %p98 = pnand %p96, %p97
      %p99 = pneg %p98
      // Predicated region
      $region9: #{tpu_custom_call.1} parent=5 // pred_check
        _
      $region10: #{tpu_custom_call.1} parent=5 // pred_check_branch
        %101 = sbr.rel (%p98) target = $region12
      $region11: #{tpu_custom_call.1} parent=5 // pred_region
        %s102 = ssub.s32 %s15, 1
        // Predicated region
        $region13: #{tpu_custom_call.1} parent=11 // pred_check
          %p103 = pneg %p36
        $region14: #{tpu_custom_call.1} parent=11 // pred_check_branch
          %105 = sbr.rel (%p103) target = $region16
        $region15: #{tpu_custom_call.1} parent=11 // pred_region
          _
        $region16: #{tpu_custom_call.1} parent=11 // pred_fallthru
          _
      $region12: #{tpu_custom_call.1} parent=5 // pred_fallthru
        _
      %p106 = scmp.lt.s32.totalorder %s15, 2
      // Predicated region
      $region17: #{tpu_custom_call.1} parent=5 // pred_check
        %p107 = pneg %p106
      $region18: #{tpu_custom_call.1} parent=5 // pred_check_branch
        %109 = sbr.rel (%p107) target = $region20
      $region19: #{tpu_custom_call.1} parent=5 // pred_region
        // Predicated region
        $region21: #{tpu_custom_call.1} parent=19 // pred_check
          %p110 = pneg %p56
        $region22: #{tpu_custom_call.1} parent=19 // pred_check_branch
          %112 = sbr.rel (%p110) target = $region24
        $region23: #{tpu_custom_call.1} parent=19 // pred_region
          %s113 = sand.u32 %s46, 1
          %s114 = scalar_lea.sflag [#allocation4], %s113
          %s115 = sand.u32 %s46, 1
          %s116 = smul.addr %s115, 8
          %s117 = scalar_lea.vmem [#allocation3], %s116
          %s119 = ssub.s32 128, 128
          %120 = vsyncadd %s114, %s119
          %s121 = smul.addr %s15, 128
          %s122 = scalar_lea.hbm %s1, %s121
          %s124 = sshll.u32 %s117, 4
          %s125 = int_to_ptr.vmem [resolvable:$true] %s124
          %127 = dma.hbm_to_vmem [thread:$0]  %s122, 128, %s125, %s114
        $region24: #{tpu_custom_call.1} parent=19 // pred_fallthru
          _
      $region20: #{tpu_custom_call.1} parent=5 // pred_fallthru
        _
      %p128 = scmp.le.s32.totalorder 1, %s15
      %p129 = scmp.lt.s32.totalorder %s15, 3
      %p130 = pnand %p128, %p129
      %p131 = pneg %p130
      // Predicated region
      $region25: #{tpu_custom_call.1} parent=5 // pred_check
        _
      $region26: #{tpu_custom_call.1} parent=5 // pred_check_branch
        %133 = sbr.rel (%p130) target = $region28
      $region27: #{tpu_custom_call.1} parent=5 // pred_region
        %s134 = ssub.s32 %s15, 1
        %s135 = sand.u32 %s49, 1
        %s136 = scalar_lea.sflag [#allocation4], %s135
        %s137 = sand.u32 %s49, 1
        %s138 = smul.addr %s137, 8
        %s139 = scalar_lea.vmem [#allocation3], %s138
        // Predicated region
        $region29: #{tpu_custom_call.1} parent=27 // pred_check
          %p140 = pneg %p62
        $region30: #{tpu_custom_call.1} parent=27 // pred_check_branch
          %142 = sbr.rel (%p140) target = $region32
        $region31: #{tpu_custom_call.1} parent=27 // pred_region
          %143 = dma.done %s136, 128
        $region32: #{tpu_custom_call.1} parent=27 // pred_fallthru
          _
        %p144 = pneg %p36
        %p145 = pneg %p33
        %s146 = sand.u32 %s49, 1
        %s147 = scalar_lea.sflag [#allocation4], %s146
        %s148 = sand.u32 %s49, 1
        %s149 = smul.addr %s148, 8
        %s150 = scalar_lea.vmem [#allocation3], %s149
        %p151 = pneg %p62
        %p152 = pneg %p59
        %p153 = pneg %p88
        %p154 = pneg %p85
        %s155 = sand.u32 %s75, 1
        %s156 = scalar_lea.sflag [#allocation5], %s155
        %s157 = sand.u32 %s75, 1
        %s158 = smul.addr %s157, 8
        %s159 = scalar_lea.vmem [#allocation6], %s158
        %s160 = sld [smem:[#allocation2]]
        %v161 = vstv %s160
        %v162 = vrcp.pop %v161
        %s163 = vtos %v162
        %s164 = smul.f32 127.0, %s163
        %v165 = vrcp.pop 127.0
        %s166 = vtos %v165
        %s167 = smul.f32 %s160, %s166
        %v168 = vld [vmem:[%s139] sm:$0xff]
        %v169 = vstv %s164
        %v170 = vmul.f32 %v168, %v169
        %v171 = vmax.f32 %v170, -128.0
        %v172 = vmin.f32 %v171, 127.0
        %v173 = vround.ne.pseudo %v172
        %v174 = vstv %s167
        %v175 = vmul.f32 %v173, %v174
        %176 = vst [vmem:[%s159] sm:$0xff] %v175
        %s177 = sand.u32 %s75, 1
        %s178 = scalar_lea.sflag [#allocation5], %s177
        %s179 = sand.u32 %s75, 1
        %s180 = smul.addr %s179, 8
        %s181 = scalar_lea.vmem [#allocation6], %s180
        // Predicated region
        $region33: #{tpu_custom_call.1} parent=27 // pred_check
          %p182 = pneg %p85
        $region34: #{tpu_custom_call.1} parent=27 // pred_check_branch
          %184 = sbr.rel (%p182) target = $region36
        $region35: #{tpu_custom_call.1} parent=27 // pred_region
          %s186 = ssub.s32 128, 128
          %187 = vsyncadd %s178, %s186
          %s188 = smul.addr %s20, 128
          %s189 = scalar_lea.hbm %s2, %s188
          %s191 = sshll.u32 %s181, 4
          %s192 = int_to_ptr.vmem [resolvable:$true] %s191
          %194 = dma.vmem_to_hbm [thread:$0]  %s192, 128, %s189, %s178
        $region36: #{tpu_custom_call.1} parent=27 // pred_fallthru
          _
      $region28: #{tpu_custom_call.1} parent=5 // pred_fallthru
        _
      %p195 = scmp.le.s32.totalorder 2, %s15
      // Predicated region
      $region37: #{tpu_custom_call.1} parent=5 // pred_check
        %p196 = pneg %p195
      $region38: #{tpu_custom_call.1} parent=5 // pred_check_branch
        %198 = sbr.rel (%p196) target = $region40
      $region39: #{tpu_custom_call.1} parent=5 // pred_region
        %s199 = ssub.s32 %s15, 2
        // Predicated region
        $region41: #{tpu_custom_call.1} parent=39 // pred_check
          %p200 = pneg %p91
        $region42: #{tpu_custom_call.1} parent=39 // pred_check_branch
          %202 = sbr.rel (%p200) target = $region44
        $region43: #{tpu_custom_call.1} parent=39 // pred_region
          %s203 = sand.u32 %s76, 1
          %s204 = scalar_lea.sflag [#allocation5], %s203
          %s205 = sand.u32 %s76, 1
          %s206 = smul.addr %s205, 8
          %s207 = scalar_lea.vmem [#allocation6], %s206
          %208 = dma.done %s204, 128
        $region44: #{tpu_custom_call.1} parent=39 // pred_fallthru
          _
      $region40: #{tpu_custom_call.1} parent=5 // pred_fallthru
        _
    $region6: #{tpu_custom_call.1} parent=1 // loop_footer
      %s19 = sadd.s32 1, %s15
    $region7: #{tpu_custom_call.1} parent=1 // loop_footer_branch
      %14 = sbr.rel target = $region3
    $region8: #{tpu_custom_call.1} parent=1 // loop_exit
      _
    %209 = vsyncpa [#allocation4], 1
    %s210 = scalar_lea.sflag [#allocation4], 1
    %211 = vsyncpa %s210, 1
    %212 = vsyncpa [#allocation5], 1
    %s213 = scalar_lea.sflag [#allocation5], 1
    %214 = vsyncpa %s213, 1

</llo_original>
